<compile_context>
chip_gen: v7x
topology: tpu7x:2x2x1
jax: 0.10.0
libtpu: 0.0.40
codegen_flags: <defaults>
</compile_context>

<pallas_src>
import functools

import jax
import jax.numpy as jnp
from jax import lax
from jax.experimental import pallas as pl
from jax.experimental.pallas import tpu as pltpu


_LANE = 128      # lane padding (last dims)
_ROW = 16        # sublane padding for node-row dims (bf16-friendly multiple of 8)


def _round_up(x, m):
    return (x + m - 1) // m * m


def _graph_constructor_kernel(z_ref, w1_ref, b1_ref, w2_ref, b2_ref,
                              anorm_ref, asparse_ref, zhat_ref, loss_ref,
                              *, top_k, n_valid, d_valid, n_rows_pad):
    """One grid step == one embedding set (step 0 = Z_t, step 1 = Z_prev).

    Shapes (lane dims 128-padded, row dims 16-padded):
      A_t      = | relu(Z @ W1 + b1) @ W2 + b2 |             [Nr, Nl]
      A_norm   = row min-max normalization (real cols only)  [Nr, Nl]
      -- step 0 only --
      A_sparse = per-row top-k sparsification of A_norm      [Nr, Nl]
      Z_hat    = A_sparse @ Z                                [Nr, Dp]
      loss     = mean((Z_hat - Z)^2) over the real N x d     (1,1)
    """
    batch = pl.program_id(0)

    z_full = z_ref[0]                               # [Nl, Dp] f32, rows >= N are zero
    z_rows = z_full[:n_rows_pad, :]                 # [Nr, Dp]
    z_rows_bf16 = z_rows.astype(jnp.bfloat16)       # hoisted: MLP lhs

    # ---- two-layer MLP over node rows: bf16 MXU operands, f32 accumulation ----
    h = jnp.dot(z_rows_bf16, w1_ref[...],
                preferred_element_type=jnp.float32) + b1_ref[...]
    h = jnp.maximum(h, 0.0)                                          # ReLU, [Nr, Hp]
    logits = jnp.dot(h.astype(jnp.bfloat16), w2_ref[...],
                     preferred_element_type=jnp.float32) + b2_ref[...]
    a_t = jnp.abs(logits)                           # [Nr, Nl]; padded cols are exactly 0

    # ---- row-wise min-max normalization (single traversal of a_t) ----
    col_valid = lax.broadcasted_iota(jnp.int32, a_t.shape, 1) < n_valid
    if n_valid == n_rows_pad:
        valid = col_valid
    else:
        row_valid = lax.broadcasted_iota(jnp.int32, a_t.shape, 0) < n_valid
        valid = col_valid & row_valid

    a_min = jnp.min(jnp.where(col_valid, a_t, jnp.inf), axis=-1, keepdims=True)
    a_max = jnp.max(a_t, axis=-1, keepdims=True)    # a_t >= 0 so padded zeros never win
    # NOTE: approx reciprocal (EUP slot) -> not bit-exact vs the reference divide.
    inv_range = pl.reciprocal(a_max - a_min + 1e-8, approx=True)     # [Nr, 1]
    a_norm_raw = (a_t - a_min) * inv_range
    a_norm = jnp.where(valid, a_norm_raw, 0.0)      # padded rows/cols exact zeros
    anorm_ref[0] = a_norm

    # ---- step 0 only: top-k sparsify, self-expressive reconstruction, MSE ----
    @pl.when(batch == 0)
    def _():
        # Per-row k-th largest via iterative max-and-mask (XLU cross-lane reduces).
        # NOTE: matches torch.topk for rows with distinct values; rows with ties
        # may keep more/fewer than k entries (same caveat as the reference scheme).
        cur0 = jnp.where(valid, a_norm_raw, -1.0)
        thr0 = jnp.max(cur0, axis=-1, keepdims=True)

        def body(_, carry):
            cur, thr = carry
            cur = jnp.where(cur >= thr, -1.0, cur)
            return cur, jnp.max(cur, axis=-1, keepdims=True)

        _, thresh = lax.fori_loop(0, top_k - 1, body, (cur0, thr0), unroll=True)

        # Invalid positions have cur0 == -1 and a_norm == 0, so they always land at 0.
        a_sparse = jnp.where(cur0 >= thresh, a_norm, 0.0)
        asparse_ref[0] = a_sparse

        z_hat = jnp.dot(a_sparse.astype(jnp.bfloat16), z_full.astype(jnp.bfloat16),
                        preferred_element_type=jnp.float32)          # [Nr, Dp]
        zhat_ref[0] = z_hat

        # Padded rows/cols of z_hat and z_rows are both exactly zero, so the raw
        # sum over the padded block equals the sum over the real N x d block.
        diff = z_hat - z_rows
        loss_ref[0] = (jnp.sum(diff * diff, keepdims=True)
                       * (1.0 / float(n_valid * d_valid)))

    @pl.when(batch != 0)
    def _():
        # Step-0-only outputs: write deterministic zeros for the other grid steps
        # (they are never read by the wrapper).
        asparse_ref[...] = jnp.zeros_like(asparse_ref)
        zhat_ref[...] = jnp.zeros_like(zhat_ref)
        loss_ref[...] = jnp.zeros_like(loss_ref)


def _run_graph_kernel(zs, w1, b1, w2, b2, *, top_k, n_valid, d_valid, n_rows_pad):
    """zs: [B, Nl, Dp] f32; w1: [Dp, Hp] bf16; b1: [1, Hp] f32;
    w2: [Hp, Nl] bf16; b2: [1, Nl] f32."""
    bsz, n_lane, d_pad = zs.shape
    h_pad = w1.shape[1]
    kernel = functools.partial(_graph_constructor_kernel, top_k=top_k,
                               n_valid=n_valid, d_valid=d_valid,
                               n_rows_pad=n_rows_pad)
    return pl.pallas_call(
        kernel,
        grid=(bsz,),
        in_specs=[
            pl.BlockSpec((1, n_lane, d_pad), lambda b: (b, 0, 0)),     # Z (per step)
            pl.BlockSpec((d_pad, h_pad), lambda b: (0, 0)),            # W1 (VMEM-resident)
            pl.BlockSpec((1, h_pad), lambda b: (0, 0)),                # b1
            pl.BlockSpec((h_pad, n_lane), lambda b: (0, 0)),           # W2
            pl.BlockSpec((1, n_lane), lambda b: (0, 0)),               # b2
        ],
        out_specs=(
            pl.BlockSpec((1, n_rows_pad, n_lane), lambda b: (b, 0, 0)),  # A_norm
            pl.BlockSpec((1, n_rows_pad, n_lane), lambda b: (b, 0, 0)),  # A_sparse
            pl.BlockSpec((1, n_rows_pad, d_pad), lambda b: (b, 0, 0)),   # Z_hat
            pl.BlockSpec((1, 1, 1), lambda b: (b, 0, 0)),                # scalar loss
        ),
        out_shape=(
            jax.ShapeDtypeStruct((bsz, n_rows_pad, n_lane), jnp.float32),
            jax.ShapeDtypeStruct((bsz, n_rows_pad, n_lane), jnp.float32),
            jax.ShapeDtypeStruct((bsz, n_rows_pad, d_pad), jnp.float32),
            jax.ShapeDtypeStruct((bsz, 1, 1), jnp.float32),
        ),
        compiler_params=pltpu.CompilerParams(
            # Every output block is per-batch-step, so the axis is truly parallel
            # and v7x can run the Z_t / Z_prev passes on its two TensorCores.
            dimension_semantics=("parallel",),
        ),
    )(zs, w1, b1, w2, b2)


def init_graph_constructor_params(num_nodes, embedding_dim, hidden_dim, key):
    """Deterministic synthetic init; shapes match nn.Linear(d,H) / nn.Linear(H,N),
    stored as [in, out] (transposed vs. the PyTorch weight layout)."""
    k1, k2, k3, k4 = jax.random.split(key, 4)
    w1 = 0.1 * jax.random.normal(k1, (embedding_dim, hidden_dim), jnp.float32)
    b1 = 0.1 * jax.random.normal(k2, (1, hidden_dim), jnp.float32)
    w2 = 0.1 * jax.random.normal(k3, (hidden_dim, num_nodes), jnp.float32)
    b2 = 0.1 * jax.random.normal(k4, (1, num_nodes), jnp.float32)
    return w1, b1, w2, b2


def _pad2(x, rows, cols, dtype=None):
    out = jnp.pad(x, ((0, rows - x.shape[0]), (0, cols - x.shape[1])))
    return out.astype(dtype) if dtype is not None else out


def graph_constructor_forward(Z_t, params, top_k, Y_t=None, Z_prev=None):
    """Mirrors GraphConstructor.forward semantics."""
    w1, b1, w2, b2 = params
    n, d = Z_t.shape
    hdim = w1.shape[1]
    n_lane = _round_up(n, _LANE)      # A columns / recon contraction dim (128-padded)
    n_rows = _round_up(n, _ROW)       # node-row (sublane) padding only
    d_pad = _round_up(d, _LANE)
    h_pad = _round_up(hdim, _LANE)

    # Zero-pad to lane-dense shapes; MXU weight operands as bf16, biases f32.
    w1_p = _pad2(w1, d_pad, h_pad, jnp.bfloat16)
    b1_p = _pad2(b1, 1, h_pad)
    w2_p = _pad2(w2, h_pad, n_lane, jnp.bfloat16)
    b2_p = _pad2(b2, 1, n_lane)

    z_list = [_pad2(Z_t.astype(jnp.float32), n_lane, d_pad)]
    if Z_prev is not None:
        z_list.append(_pad2(Z_prev.astype(jnp.float32), n_lane, d_pad))
    zs = jnp.stack(z_list, axis=0)

    anorm_all, asparse_all, zhat_all, loss_all = _run_graph_kernel(
        zs, w1_p, b1_p, w2_p, b2_p,
        top_k=top_k, n_valid=n, d_valid=d, n_rows_pad=n_rows)

    A_norm = anorm_all[0, :n, :n]
    A_sparse = asparse_all[0, :n, :n]
    Z_hat = zhat_all[0, :n, :d]
    L_reconstruct = loss_all[0, 0, 0]

    L_IB_predict = jnp.float32(0.0)
    L_IB_redundancy = jnp.float32(0.0)
    # TODO(synk): PyTorch reference leaves the Y_t branch as `pass`; nothing to do.

    L_smooth = jnp.float32(0.0)
    if Z_prev is not None:
        # Tiny fused XLA reduction on data the kernel already materialized.
        A_prev_norm = anorm_all[1, :n, :n]
        L_smooth = jnp.mean((A_norm - A_prev_norm) ** 2)

    phi = A_sparse  # already non-negative by construction; abs() would be redundant
    losses = {
        "reconstruct": L_reconstruct,
        "smooth": L_smooth,
        "IB_predict": L_IB_predict,
        "IB_redundancy": L_IB_redundancy,
    }
    return Z_hat, A_norm, A_sparse, phi, losses


if __name__ == "__main__":
    num_nodes = 16
    embedding_dim = 32
    hidden_dim = 32
    top_k = 4

    key = jax.random.PRNGKey(0)
    kp, kz, kzp = jax.random.split(key, 3)

    params = init_graph_constructor_params(num_nodes, embedding_dim, hidden_dim, kp)
    Z_t = jax.random.normal(kz, (num_nodes, embedding_dim), jnp.float32)
    Z_prev = jax.random.normal(kzp, (num_nodes, embedding_dim), jnp.float32)

    fwd = jax.jit(functools.partial(graph_constructor_forward, top_k=top_k))
    Z_hat, A_norm, A_sparse, phi, losses = fwd(Z_t, params, Z_prev=Z_prev)
    jax.block_until_ready((Z_hat, A_norm, A_sparse, phi, losses))

    # Light sanity checks (shapes, normalization properties, top-k sparsity, finite losses).
    assert Z_hat.shape == (num_nodes, embedding_dim)
    assert A_norm.shape == (num_nodes, num_nodes)
    assert A_sparse.shape == (num_nodes, num_nodes)
    assert float(A_norm.min()) >= -1e-6
    row_max = A_norm.max(axis=-1)
    assert bool(jnp.all(jnp.abs(row_max - 1.0) < 0.05))   # min-max rows peak at ~1
    nnz_per_row = (A_sparse > 0).sum(axis=-1)
    assert int(nnz_per_row.max()) <= top_k                 # exact k for distinct-valued rows
    assert int(nnz_per_row.min()) >= 1
    assert bool(jnp.isfinite(losses["reconstruct"]))
    assert bool(jnp.isfinite(losses["smooth"]))

    print("KERNEL_OK")
</pallas_src>

<mosaic_0001>
module attributes {stable_mosaic.version = 11 : i64} {
  func.func @_graph_constructor_kernel(%arg0: i32, %arg1: memref<1x128x128xf32, #tpu.memory_space<vmem>>, %arg2: memref<128x128xbf16, #tpu.memory_space<vmem>>, %arg3: memref<1x128xf32, #tpu.memory_space<vmem>>, %arg4: memref<128x128xbf16, #tpu.memory_space<vmem>>, %arg5: memref<1x128xf32, #tpu.memory_space<vmem>>, %arg6: memref<1x16x128xf32, #tpu.memory_space<vmem>>, %arg7: memref<1x16x128xf32, #tpu.memory_space<vmem>>, %arg8: memref<1x16x128xf32, #tpu.memory_space<vmem>>, %arg9: memref<1x1x1xf32, #tpu.memory_space<vmem>>) attributes {dimension_semantics = [#tpu.dimension_semantics<parallel>], iteration_bounds = array<i64: 2>, scalar_prefetch = 0 : i64, scratch_operands = 0 : i64, tpu.core_type = #tpu.core_type<tc>, window_params = [{transform_indices = @transform_0, window_bounds = array<i64: 1, 128, 128>}, {pipeline_mode = #tpu.pipeline_mode<synchronous>, transform_indices = @transform_1, window_bounds = array<i64: 128, 128>}, {pipeline_mode = #tpu.pipeline_mode<synchronous>, transform_indices = @transform_2, window_bounds = array<i64: 1, 128>}, {pipeline_mode = #tpu.pipeline_mode<synchronous>, transform_indices = @transform_3, window_bounds = array<i64: 128, 128>}, {pipeline_mode = #tpu.pipeline_mode<synchronous>, transform_indices = @transform_4, window_bounds = array<i64: 1, 128>}, {transform_indices = @transform_5, window_bounds = array<i64: 1, 16, 128>}, {transform_indices = @transform_6, window_bounds = array<i64: 1, 16, 128>}, {transform_indices = @transform_7, window_bounds = array<i64: 1, 16, 128>}, {transform_indices = @transform_8, window_bounds = array<i64: 1, 1, 1>}]} {
    %c0 = arith.constant 0 : index
    %c0_0 = arith.constant 0 : index
    %c0_1 = arith.constant 0 : index
    %0 = vector.load %arg1[%c0, %c0_0, %c0_1] : memref<1x128x128xf32, #tpu.memory_space<vmem>>, vector<1x128x128xf32>
    %1 = vector.shape_cast %0 : vector<1x128x128xf32> to vector<128x128xf32>
    %2 = vector.extract_strided_slice %1 {offsets = [0, 0], sizes = [16, 128], strides = [1, 1]} : vector<128x128xf32> to vector<16x128xf32>
    %3 = arith.truncf %2 : vector<16x128xf32> to vector<16x128xbf16>
    %c0_2 = arith.constant 0 : index
    %c0_3 = arith.constant 0 : index
    %4 = vector.load %arg2[%c0_2, %c0_3] : memref<128x128xbf16, #tpu.memory_space<vmem>>, vector<128x128xbf16>
    %cst = arith.constant dense<0.000000e+00> : vector<16x128xf32>
    %5 = tpu.matmul %3, %4, %cst {dimension_numbers = #tpu.dot_dimension_numbers<[1], [0], [0], [1], [0, 0, 1, 1], [], []>} : vector<16x128xbf16>, vector<128x128xbf16>, vector<16x128xf32> -> vector<16x128xf32>
    %c0_4 = arith.constant 0 : index
    %c0_5 = arith.constant 0 : index
    %6 = vector.load %arg3[%c0_4, %c0_5] : memref<1x128xf32, #tpu.memory_space<vmem>>, vector<1x128xf32>
    %7 = vector.broadcast %6 : vector<1x128xf32> to vector<16x128xf32>
    %8 = arith.addf %5, %7 : vector<16x128xf32>
    %cst_6 = arith.constant 0.000000e+00 : f32
    %9 = vector.broadcast %cst_6 : f32 to vector<16x128xf32>
    %10 = arith.maximumf %8, %9 : vector<16x128xf32>
    %11 = arith.truncf %10 : vector<16x128xf32> to vector<16x128xbf16>
    %c0_7 = arith.constant 0 : index
    %c0_8 = arith.constant 0 : index
    %12 = vector.load %arg4[%c0_7, %c0_8] : memref<128x128xbf16, #tpu.memory_space<vmem>>, vector<128x128xbf16>
    %cst_9 = arith.constant dense<0.000000e+00> : vector<16x128xf32>
    %13 = tpu.matmul %11, %12, %cst_9 {dimension_numbers = #tpu.dot_dimension_numbers<[1], [0], [0], [1], [0, 0, 1, 1], [], []>} : vector<16x128xbf16>, vector<128x128xbf16>, vector<16x128xf32> -> vector<16x128xf32>
    %c0_10 = arith.constant 0 : index
    %c0_11 = arith.constant 0 : index
    %14 = vector.load %arg5[%c0_10, %c0_11] : memref<1x128xf32, #tpu.memory_space<vmem>>, vector<1x128xf32>
    %15 = vector.broadcast %14 : vector<1x128xf32> to vector<16x128xf32>
    %16 = arith.addf %13, %15 : vector<16x128xf32>
    %17 = math.absf %16 : vector<16x128xf32>
    %18 = tpu.iota {dimensions = array<i32: 1>} : vector<16x128xi32>
    %c16_i32 = arith.constant 16 : i32
    %19 = vector.broadcast %c16_i32 : i32 to vector<16x128xi32>
    %20 = arith.cmpi slt, %18, %19 : vector<16x128xi32>
    %cst_12 = arith.constant 0x7F800000 : f32
    %21 = vector.broadcast %cst_12 : f32 to vector<16x128xf32>
    %22 = arith.select %20, %17, %21 : vector<16x128xi1>, vector<16x128xf32>
    %cst_13 = arith.constant dense<0x7F800000> : vector<16xf32>
    %23 = vector.multi_reduction <minimumf>, %22, %cst_13 [1] : vector<16x128xf32> to vector<16xf32>
    %24 = vector.shape_cast %23 : vector<16xf32> to vector<16x1xf32>
    %cst_14 = arith.constant dense<0xFF800000> : vector<16xf32>
    %25 = vector.multi_reduction <maximumf>, %17, %cst_14 [1] : vector<16x128xf32> to vector<16xf32>
    %26 = vector.shape_cast %25 : vector<16xf32> to vector<16x1xf32>
    %27 = arith.subf %26, %24 : vector<16x1xf32>
    %cst_15 = arith.constant 9.99999993E-9 : f32
    %28 = vector.broadcast %cst_15 : f32 to vector<16x1xf32>
    %29 = arith.addf %27, %28 : vector<16x1xf32>
    %30 = tpu.reciprocal %29 {approx = true} : vector<16x1xf32> -> vector<16x1xf32>
    %31 = vector.broadcast %24 : vector<16x1xf32> to vector<16x128xf32>
    %32 = arith.subf %17, %31 : vector<16x128xf32>
    %33 = vector.broadcast %30 : vector<16x1xf32> to vector<16x128xf32>
    %34 = arith.mulf %32, %33 : vector<16x128xf32>
    %cst_16 = arith.constant 0.000000e+00 : f32
    %35 = vector.broadcast %cst_16 : f32 to vector<16x128xf32>
    %36 = arith.select %20, %34, %35 : vector<16x128xi1>, vector<16x128xf32>
    %c0_17 = arith.constant 0 : index
    %c0_18 = arith.constant 0 : index
    %c0_19 = arith.constant 0 : index
    %37 = vector.load %arg6[%c0_17, %c0_18, %c0_19] : memref<1x16x128xf32, #tpu.memory_space<vmem>>, vector<1x16x128xf32>
    %38 = vector.shape_cast %37 : vector<1x16x128xf32> to vector<16x128xf32>
    %39 = vector.shape_cast %36 : vector<16x128xf32> to vector<1x16x128xf32>
    tpu.vector_store %arg6[%c0_17, %c0_18, %c0_19], %39 {strides = array<i32>} : memref<1x16x128xf32, #tpu.memory_space<vmem>>, vector<1x16x128xf32>,
    %c0_i32 = arith.constant 0 : i32
    %40 = arith.cmpi eq, %arg0, %c0_i32 : i32
    %41 = arith.extui %40 : i1 to i32
    %c0_i32_20 = arith.constant 0 : i32
    %42 = arith.cmpi ne, %41, %c0_i32_20 : i32
    scf.if %42 {
      %cst_23 = arith.constant -1.000000e+00 : f32
      %46 = vector.broadcast %cst_23 : f32 to vector<16x128xf32>
      %47 = arith.select %20, %34, %46 : vector<16x128xi1>, vector<16x128xf32>
      %cst_24 = arith.constant dense<0xFF800000> : vector<16xf32>
      %48 = vector.multi_reduction <maximumf>, %47, %cst_24 [1] : vector<16x128xf32> to vector<16xf32>
      %49 = vector.shape_cast %48 : vector<16xf32> to vector<16x1xf32>
      %c0_i32_25 = arith.constant 0 : i32
      %50 = vector.broadcast %49 : vector<16x1xf32> to vector<16x128xf32>
      %51 = arith.cmpf oge, %47, %50 : vector<16x128xf32>
      %cst_26 = arith.constant -1.000000e+00 : f32
      %52 = vector.broadcast %cst_26 : f32 to vector<16x128xf32>
      %53 = arith.select %51, %52, %47 : vector<16x128xi1>, vector<16x128xf32>
      %cst_27 = arith.constant dense<0xFF800000> : vector<16xf32>
      %54 = vector.multi_reduction <maximumf>, %53, %cst_27 [1] : vector<16x128xf32> to vector<16xf32>
      %55 = vector.shape_cast %54 : vector<16xf32> to vector<16x1xf32>
      %c1_i32 = arith.constant 1 : i32
      %56 = vector.broadcast %55 : vector<16x1xf32> to vector<16x128xf32>
      %57 = arith.cmpf oge, %53, %56 : vector<16x128xf32>
      %cst_28 = arith.constant -1.000000e+00 : f32
      %58 = vector.broadcast %cst_28 : f32 to vector<16x128xf32>
      %59 = arith.select %57, %58, %53 : vector<16x128xi1>, vector<16x128xf32>
      %cst_29 = arith.constant dense<0xFF800000> : vector<16xf32>
      %60 = vector.multi_reduction <maximumf>, %59, %cst_29 [1] : vector<16x128xf32> to vector<16xf32>
      %61 = vector.shape_cast %60 : vector<16xf32> to vector<16x1xf32>
      %c2_i32 = arith.constant 2 : i32
      %62 = vector.broadcast %61 : vector<16x1xf32> to vector<16x128xf32>
      %63 = arith.cmpf oge, %59, %62 : vector<16x128xf32>
      %cst_30 = arith.constant -1.000000e+00 : f32
      %64 = vector.broadcast %cst_30 : f32 to vector<16x128xf32>
      %65 = arith.select %63, %64, %59 : vector<16x128xi1>, vector<16x128xf32>
      %cst_31 = arith.constant dense<0xFF800000> : vector<16xf32>
      %66 = vector.multi_reduction <maximumf>, %65, %cst_31 [1] : vector<16x128xf32> to vector<16xf32>
      %67 = vector.shape_cast %66 : vector<16xf32> to vector<16x1xf32>
      %68 = vector.broadcast %67 : vector<16x1xf32> to vector<16x128xf32>
      %69 = arith.cmpf oge, %47, %68 : vector<16x128xf32>
      %cst_32 = arith.constant 0.000000e+00 : f32
      %70 = vector.broadcast %cst_32 : f32 to vector<16x128xf32>
      %71 = arith.select %69, %36, %70 : vector<16x128xi1>, vector<16x128xf32>
      %c0_33 = arith.constant 0 : index
      %c0_34 = arith.constant 0 : index
      %c0_35 = arith.constant 0 : index
      %72 = vector.load %arg7[%c0_33, %c0_34, %c0_35] : memref<1x16x128xf32, #tpu.memory_space<vmem>>, vector<1x16x128xf32>
      %73 = vector.shape_cast %72 : vector<1x16x128xf32> to vector<16x128xf32>
      %74 = vector.shape_cast %71 : vector<16x128xf32> to vector<1x16x128xf32>
      tpu.vector_store %arg7[%c0_33, %c0_34, %c0_35], %74 {strides = array<i32>} : memref<1x16x128xf32, #tpu.memory_space<vmem>>, vector<1x16x128xf32>,
      %75 = arith.truncf %71 : vector<16x128xf32> to vector<16x128xbf16>
      %76 = arith.truncf %1 : vector<128x128xf32> to vector<128x128xbf16>
      %cst_36 = arith.constant dense<0.000000e+00> : vector<16x128xf32>
      %77 = tpu.matmul %75, %76, %cst_36 {dimension_numbers = #tpu.dot_dimension_numbers<[1], [0], [0], [1], [0, 0, 1, 1], [], []>} : vector<16x128xbf16>, vector<128x128xbf16>, vector<16x128xf32> -> vector<16x128xf32>
      %c0_37 = arith.constant 0 : index
      %c0_38 = arith.constant 0 : index
      %c0_39 = arith.constant 0 : index
      %78 = vector.load %arg8[%c0_37, %c0_38, %c0_39] : memref<1x16x128xf32, #tpu.memory_space<vmem>>, vector<1x16x128xf32>
      %79 = vector.shape_cast %78 : vector<1x16x128xf32> to vector<16x128xf32>
      %80 = vector.shape_cast %77 : vector<16x128xf32> to vector<1x16x128xf32>
      tpu.vector_store %arg8[%c0_37, %c0_38, %c0_39], %80 {strides = array<i32>} : memref<1x16x128xf32, #tpu.memory_space<vmem>>, vector<1x16x128xf32>,
      %81 = arith.subf %77, %2 : vector<16x128xf32>
      %82 = arith.mulf %81, %81 : vector<16x128xf32>
      %83 = vector.shape_cast %82 : vector<16x128xf32> to vector<1x16x128xf32>
      %cst_40 = arith.constant dense<0.000000e+00> : vector<1xf32>
      %84 = vector.multi_reduction <add>, %83, %cst_40 [1, 2] : vector<1x16x128xf32> to vector<1xf32>
      %85 = vector.shape_cast %84 : vector<1xf32> to vector<1x1x1xf32>
      %86 = vector.extract %85[0, 0, 0] : f32 from vector<1x1x1xf32>
      %87 = vector.broadcast %86 : f32 to vector<1x1xf32>
      %cst_41 = arith.constant 0.001953125 : f32
      %88 = vector.broadcast %cst_41 : f32 to vector<1x1xf32>
      %89 = arith.mulf %87, %88 : vector<1x1xf32>
      %c0_42 = arith.constant 0 : index
      %c0_43 = arith.constant 0 : index
      %c0_44 = arith.constant 0 : index
      %90 = vector.load %arg9[%c0_42, %c0_43, %c0_44] : memref<1x1x1xf32, #tpu.memory_space<vmem>>, vector<1x1x1xf32>
      %91 = vector.shape_cast %90 : vector<1x1x1xf32> to vector<1x1xf32>
      %92 = vector.shape_cast %89 : vector<1x1xf32> to vector<1x1x1xf32>
      tpu.vector_store %arg9[%c0_42, %c0_43, %c0_44], %92 {strides = array<i32>} : memref<1x1x1xf32, #tpu.memory_space<vmem>>, vector<1x1x1xf32>,
    } else {
    }
    %c0_i32_21 = arith.constant 0 : i32
    %43 = arith.cmpi ne, %arg0, %c0_i32_21 : i32
    %44 = arith.extui %43 : i1 to i32
    %c0_i32_22 = arith.constant 0 : i32
    %45 = arith.cmpi ne, %44, %c0_i32_22 : i32
    scf.if %45 {
      %cst_23 = arith.constant 0.000000e+00 : f32
      %46 = vector.broadcast %cst_23 : f32 to vector<1x16x128xf32>
      %c0_24 = arith.constant 0 : index
      %c0_25 = arith.constant 0 : index
      %c0_26 = arith.constant 0 : index
      %47 = vector.load %arg7[%c0_24, %c0_25, %c0_26] : memref<1x16x128xf32, #tpu.memory_space<vmem>>, vector<1x16x128xf32>
      tpu.vector_store %arg7[%c0_24, %c0_25, %c0_26], %46 {strides = array<i32>} : memref<1x16x128xf32, #tpu.memory_space<vmem>>, vector<1x16x128xf32>,
      %cst_27 = arith.constant 0.000000e+00 : f32
      %48 = vector.broadcast %cst_27 : f32 to vector<1x16x128xf32>
      %c0_28 = arith.constant 0 : index
      %c0_29 = arith.constant 0 : index
      %c0_30 = arith.constant 0 : index
      %49 = vector.load %arg8[%c0_28, %c0_29, %c0_30] : memref<1x16x128xf32, #tpu.memory_space<vmem>>, vector<1x16x128xf32>
      tpu.vector_store %arg8[%c0_28, %c0_29, %c0_30], %48 {strides = array<i32>} : memref<1x16x128xf32, #tpu.memory_space<vmem>>, vector<1x16x128xf32>,
      %cst_31 = arith.constant 0.000000e+00 : f32
      %50 = vector.broadcast %cst_31 : f32 to vector<1x1x1xf32>
      %c0_32 = arith.constant 0 : index
      %c0_33 = arith.constant 0 : index
      %c0_34 = arith.constant 0 : index
      %51 = vector.load %arg9[%c0_32, %c0_33, %c0_34] : memref<1x1x1xf32, #tpu.memory_space<vmem>>, vector<1x1x1xf32>
      tpu.vector_store %arg9[%c0_32, %c0_33, %c0_34], %50 {strides = array<i32>} : memref<1x1x1xf32, #tpu.memory_space<vmem>>, vector<1x1x1xf32>,
    } else {
    }
    return
  }
  func.func @transform_0(%arg0: i32) -> (i32, i32, i32) {
    %c0_i32 = arith.constant 0 : i32
    %c0_i32_0 = arith.constant 0 : i32
    %c0_i32_1 = arith.constant 0 : i32
    return %arg0, %c0_i32, %c0_i32_0 : i32, i32, i32
  }
  func.func @transform_1(%arg0: i32) -> (i32, i32) {
    %c0_i32 = arith.constant 0 : i32
    %c0_i32_0 = arith.constant 0 : i32
    %c0_i32_1 = arith.constant 0 : i32
    return %c0_i32, %c0_i32_0 : i32, i32
  }
  func.func @transform_2(%arg0: i32) -> (i32, i32) {
    %c0_i32 = arith.constant 0 : i32
    %c0_i32_0 = arith.constant 0 : i32
    %c0_i32_1 = arith.constant 0 : i32
    return %c0_i32, %c0_i32_0 : i32, i32
  }
  func.func @transform_3(%arg0: i32) -> (i32, i32) {
    %c0_i32 = arith.constant 0 : i32
    %c0_i32_0 = arith.constant 0 : i32
    %c0_i32_1 = arith.constant 0 : i32
    return %c0_i32, %c0_i32_0 : i32, i32
  }
  func.func @transform_4(%arg0: i32) -> (i32, i32) {
    %c0_i32 = arith.constant 0 : i32
    %c0_i32_0 = arith.constant 0 : i32
    %c0_i32_1 = arith.constant 0 : i32
    return %c0_i32, %c0_i32_0 : i32, i32
  }
  func.func @transform_5(%arg0: i32) -> (i32, i32, i32) {
    %c0_i32 = arith.constant 0 : i32
    %c0_i32_0 = arith.constant 0 : i32
    %c0_i32_1 = arith.constant 0 : i32
    return %arg0, %c0_i32, %c0_i32_0 : i32, i32, i32
  }
  func.func @transform_6(%arg0: i32) -> (i32, i32, i32) {
    %c0_i32 = arith.constant 0 : i32
    %c0_i32_0 = arith.constant 0 : i32
    %c0_i32_1 = arith.constant 0 : i32
    return %arg0, %c0_i32, %c0_i32_0 : i32, i32, i32
  }
  func.func @transform_7(%arg0: i32) -> (i32, i32, i32) {
    %c0_i32 = arith.constant 0 : i32
    %c0_i32_0 = arith.constant 0 : i32
    %c0_i32_1 = arith.constant 0 : i32
    return %arg0, %c0_i32, %c0_i32_0 : i32, i32, i32
  }
  func.func @transform_8(%arg0: i32) -> (i32, i32, i32) {
    %c0_i32 = arith.constant 0 : i32
    %c0_i32_0 = arith.constant 0 : i32
    %c0_i32_1 = arith.constant 0 : i32
    return %arg0, %c0_i32, %c0_i32_0 : i32, i32, i32
  }
}

</mosaic_0001>

<llo_original>
// kernel: graph_constructor_forward.1
$region0: #{graph_constructor_forward.1}
  #allocation0 [shape = 'u32[]', space=smem, size = 0x4, offset = 0x4, fixed_abs, tag = 'smem constant byte address 0x4 - core index']
  #allocation1 [shape = 'u32[144,128]{1,0:T(1,128)}', space=vmem, size = 0x12000, scoped, tag = 'internal scratch']
  %s0 = inlined_call_operand.vmem [shape: f32[2,128,128], index: 0, kind: input, shape index: {}]
  %s1 = inlined_call_operand.vmem [shape: bf16[128,128], index: 1, kind: input, shape index: {}]
  %s2 = inlined_call_operand.vmem [shape: f32[1,128], index: 2, kind: input, shape index: {}]
  %s3 = inlined_call_operand.vmem [shape: bf16[128,128], index: 3, kind: input, shape index: {}]
  %s4 = inlined_call_operand.vmem [shape: f32[1,128], index: 4, kind: input, shape index: {}]
  %s5 = inlined_call_operand.vmem [shape: f32[2,16,128], index: 5, kind: output, shape index: {0}]
  %s6 = inlined_call_operand.vmem [shape: f32[2,16,128], index: 6, kind: output, shape index: {1}]
  %s7 = inlined_call_operand.vmem [shape: f32[2,16,128], index: 7, kind: output, shape index: {2}]
  %s8 = inlined_call_operand.vmem [shape: f32[2,1,1], index: 8, kind: output, shape index: {3}]
  %9 = xla_tuple %s5, %s6, %s7, %s8
  %s10 = sld [smem:[#allocation0]]
  $region85: #{graph_constructor_forward.1} parent=0
    _
  %s12 = ssub.s32 1, %s10
  %s13 = scalar_select 0, %s12, %s10
  loop: start=0, step=1, limit=4
  $region2: #{graph_constructor_forward.1} parent=0 // loop_pre_header
    _
  $region3: #{graph_constructor_forward.1} parent=0 // loop_header
    %s15 = sphi 0, %s19
    %p16 = scmp.ge.s32.totalorder %s15, 4
    %s25 = sphi 0, %s27
    %s28 = sphi 0, %s25
    %s29 = sphi 0, %s28
    %s45 = sphi 0, %s29
    %s49 = sphi 0, %s49
    %s51 = sphi 0, %s49
    %s52 = sphi 0, %s51
    %s66 = sphi 0, %s52
    %s70 = sphi 0, %s70
    %s72 = sphi 0, %s70
    %s73 = sphi 0, %s72
    %s87 = sphi 0, %s73
    %s91 = sphi 0, %s91
    %s93 = sphi 0, %s91
    %s94 = sphi 0, %s93
    %s108 = sphi 0, %s94
    %s112 = sphi 0, %s112
    %s114 = sphi 0, %s112
    %s115 = sphi 0, %s114
    %s129 = sphi 0, %s115
    %s135 = sphi 0, %s137
    %s138 = sphi 0, %s135
    %s139 = sphi 0, %s138
    %s155 = sphi 0, %s139
    %s161 = sphi 0, %s163
    %s164 = sphi 0, %s161
    %s165 = sphi 0, %s164
    %s181 = sphi 0, %s165
    %s187 = sphi 0, %s189
    %s190 = sphi 0, %s187
    %s191 = sphi 0, %s190
    %s207 = sphi 0, %s191
    %s213 = sphi 0, %s215
    %s216 = sphi 0, %s213
    %s217 = sphi 0, %s216
    %s233 = sphi 0, %s217
  $region4: #{graph_constructor_forward.1} parent=0 // loop_header_branch
    %18 = sbr.rel (%p16) target = $region8
  $region5: #{graph_constructor_forward.1} parent=0 // loop_body
    %s20 = ssub.s32 %s15, 1
    %s21 = ssub.s32 %s15, 2
    %s22 = sadd.s32 %s15, 1
    %s23 = ssub.s32 %s15, %s22
    %p24 = scmp.eq.s32.totalorder %s23, 0
    %s26 = sadd.s32 %s25, 1
    %s27 = scalar_select %p24, %s25, %s26
    %p30 = pneg %p24
    %p31 = scmp.eq.s32.totalorder %s15, 1
    %p32 = por %p30, %p31
    %p33 = scmp.ne.s32.totalorder %s25, %s28
    %p34 = scmp.eq.s32.totalorder %s15, 0
    %p35 = por %p33, %p34
    %p36 = scmp.ne.s32.totalorder %s25, %s28
    %p37 = scmp.eq.s32.totalorder %s20, 1
    %p38 = por %p36, %p37
    %p39 = scmp.ne.s32.totalorder %s28, %s29
    %p40 = scmp.eq.s32.totalorder %s20, 0
    %p41 = por %p39, %p40
    %p42 = scmp.ne.s32.totalorder %s28, %s29
    %p43 = scmp.eq.s32.totalorder %s21, 1
    %p44 = por %p42, %p43
    %p46 = scmp.ne.s32.totalorder %s29, %s45
    %p47 = scmp.eq.s32.totalorder %s21, 0
    %p48 = por %p46, %p47
    %s50 = sadd.s32 %s49, 1
    %p53 = scmp.eq.s32.totalorder %s15, 1
    %p54 = scmp.ne.s32.totalorder %s49, %s51
    %p55 = scmp.eq.s32.totalorder %s15, 0
    %p56 = por %p54, %p55
    %p57 = scmp.ne.s32.totalorder %s49, %s51
    %p58 = scmp.eq.s32.totalorder %s20, 1
    %p59 = por %p57, %p58
    %p60 = scmp.ne.s32.totalorder %s51, %s52
    %p61 = scmp.eq.s32.totalorder %s20, 0
    %p62 = por %p60, %p61
    %p63 = scmp.ne.s32.totalorder %s51, %s52
    %p64 = scmp.eq.s32.totalorder %s21, 1
    %p65 = por %p63, %p64
    %p67 = scmp.ne.s32.totalorder %s52, %s66
    %p68 = scmp.eq.s32.totalorder %s21, 0
    %p69 = por %p67, %p68
    %s71 = sadd.s32 %s70, 1
    %p74 = scmp.eq.s32.totalorder %s15, 1
    %p75 = scmp.ne.s32.totalorder %s70, %s72
    %p76 = scmp.eq.s32.totalorder %s15, 0
    %p77 = por %p75, %p76
    %p78 = scmp.ne.s32.totalorder %s70, %s72
    %p79 = scmp.eq.s32.totalorder %s20, 1
    %p80 = por %p78, %p79
    %p81 = scmp.ne.s32.totalorder %s72, %s73
    %p82 = scmp.eq.s32.totalorder %s20, 0
    %p83 = por %p81, %p82
    %p84 = scmp.ne.s32.totalorder %s72, %s73
    %p85 = scmp.eq.s32.totalorder %s21, 1
    %p86 = por %p84, %p85
    %p88 = scmp.ne.s32.totalorder %s73, %s87
    %p89 = scmp.eq.s32.totalorder %s21, 0
    %p90 = por %p88, %p89
    %s92 = sadd.s32 %s91, 1
    %p95 = scmp.eq.s32.totalorder %s15, 1
    %p96 = scmp.ne.s32.totalorder %s91, %s93
    %p97 = scmp.eq.s32.totalorder %s15, 0
    %p98 = por %p96, %p97
    %p99 = scmp.ne.s32.totalorder %s91, %s93
    %p100 = scmp.eq.s32.totalorder %s20, 1
    %p101 = por %p99, %p100
    %p102 = scmp.ne.s32.totalorder %s93, %s94
    %p103 = scmp.eq.s32.totalorder %s20, 0
    %p104 = por %p102, %p103
    %p105 = scmp.ne.s32.totalorder %s93, %s94
    %p106 = scmp.eq.s32.totalorder %s21, 1
    %p107 = por %p105, %p106
    %p109 = scmp.ne.s32.totalorder %s94, %s108
    %p110 = scmp.eq.s32.totalorder %s21, 0
    %p111 = por %p109, %p110
    %s113 = sadd.s32 %s112, 1
    %p116 = scmp.eq.s32.totalorder %s15, 1
    %p117 = scmp.ne.s32.totalorder %s112, %s114
    %p118 = scmp.eq.s32.totalorder %s15, 0
    %p119 = por %p117, %p118
    %p120 = scmp.ne.s32.totalorder %s112, %s114
    %p121 = scmp.eq.s32.totalorder %s20, 1
    %p122 = por %p120, %p121
    %p123 = scmp.ne.s32.totalorder %s114, %s115
    %p124 = scmp.eq.s32.totalorder %s20, 0
    %p125 = por %p123, %p124
    %p126 = scmp.ne.s32.totalorder %s114, %s115
    %p127 = scmp.eq.s32.totalorder %s21, 1
    %p128 = por %p126, %p127
    %p130 = scmp.ne.s32.totalorder %s115, %s129
    %p131 = scmp.eq.s32.totalorder %s21, 0
    %p132 = por %p130, %p131
    %s133 = ssub.s32 %s15, %s22
    %p134 = scmp.eq.s32.totalorder %s133, 0
    %s136 = sadd.s32 %s135, 1
    %s137 = scalar_select %p134, %s135, %s136
    %p140 = pneg %p134
    %p141 = scmp.eq.s32.totalorder %s15, 1
    %p142 = por %p140, %p141
    %p143 = scmp.ne.s32.totalorder %s135, %s138
    %p144 = scmp.eq.s32.totalorder %s15, 0
    %p145 = por %p143, %p144
    %p146 = scmp.ne.s32.totalorder %s135, %s138
    %p147 = scmp.eq.s32.totalorder %s20, 1
    %p148 = por %p146, %p147
    %p149 = scmp.ne.s32.totalorder %s138, %s139
    %p150 = scmp.eq.s32.totalorder %s20, 0
    %p151 = por %p149, %p150
    %p152 = scmp.ne.s32.totalorder %s138, %s139
    %p153 = scmp.eq.s32.totalorder %s21, 1
    %p154 = por %p152, %p153
    %p156 = scmp.ne.s32.totalorder %s139, %s155
    %p157 = scmp.eq.s32.totalorder %s21, 0
    %p158 = por %p156, %p157
    %s159 = ssub.s32 %s15, %s22
    %p160 = scmp.eq.s32.totalorder %s159, 0
    %s162 = sadd.s32 %s161, 1
    %s163 = scalar_select %p160, %s161, %s162
    %p166 = pneg %p160
    %p167 = scmp.eq.s32.totalorder %s15, 1
    %p168 = por %p166, %p167
    %p169 = scmp.ne.s32.totalorder %s161, %s164
    %p170 = scmp.eq.s32.totalorder %s15, 0
    %p171 = por %p169, %p170
    %p172 = scmp.ne.s32.totalorder %s161, %s164
    %p173 = scmp.eq.s32.totalorder %s20, 1
    %p174 = por %p172, %p173
    %p175 = scmp.ne.s32.totalorder %s164, %s165
    %p176 = scmp.eq.s32.totalorder %s20, 0
    %p177 = por %p175, %p176
    %p178 = scmp.ne.s32.totalorder %s164, %s165
    %p179 = scmp.eq.s32.totalorder %s21, 1
    %p180 = por %p178, %p179
    %p182 = scmp.ne.s32.totalorder %s165, %s181
    %p183 = scmp.eq.s32.totalorder %s21, 0
    %p184 = por %p182, %p183
    %s185 = ssub.s32 %s15, %s22
    %p186 = scmp.eq.s32.totalorder %s185, 0
    %s188 = sadd.s32 %s187, 1
    %s189 = scalar_select %p186, %s187, %s188
    %p192 = pneg %p186
    %p193 = scmp.eq.s32.totalorder %s15, 1
    %p194 = por %p192, %p193
    %p195 = scmp.ne.s32.totalorder %s187, %s190
    %p196 = scmp.eq.s32.totalorder %s15, 0
    %p197 = por %p195, %p196
    %p198 = scmp.ne.s32.totalorder %s187, %s190
    %p199 = scmp.eq.s32.totalorder %s20, 1
    %p200 = por %p198, %p199
    %p201 = scmp.ne.s32.totalorder %s190, %s191
    %p202 = scmp.eq.s32.totalorder %s20, 0
    %p203 = por %p201, %p202
    %p204 = scmp.ne.s32.totalorder %s190, %s191
    %p205 = scmp.eq.s32.totalorder %s21, 1
    %p206 = por %p204, %p205
    %p208 = scmp.ne.s32.totalorder %s191, %s207
    %p209 = scmp.eq.s32.totalorder %s21, 0
    %p210 = por %p208, %p209
    %s211 = ssub.s32 %s15, %s22
    %p212 = scmp.eq.s32.totalorder %s211, 0
    %s214 = sadd.s32 %s213, 1
    %s215 = scalar_select %p212, %s213, %s214
    %p218 = pneg %p212
    %p219 = scmp.eq.s32.totalorder %s15, 1
    %p220 = por %p218, %p219
    %p221 = scmp.ne.s32.totalorder %s213, %s216
    %p222 = scmp.eq.s32.totalorder %s15, 0
    %p223 = por %p221, %p222
    %p224 = scmp.ne.s32.totalorder %s213, %s216
    %p225 = scmp.eq.s32.totalorder %s20, 1
    %p226 = por %p224, %p225
    %p227 = scmp.ne.s32.totalorder %s216, %s217
    %p228 = scmp.eq.s32.totalorder %s20, 0
    %p229 = por %p227, %p228
    %p230 = scmp.ne.s32.totalorder %s216, %s217
    %p231 = scmp.eq.s32.totalorder %s21, 1
    %p232 = por %p230, %p231
    %p234 = scmp.ne.s32.totalorder %s217, %s233
    %p235 = scmp.eq.s32.totalorder %s21, 0
    %p236 = por %p234, %p235
    %p237 = scmp.le.s32.totalorder 1, %s15
    %p238 = scmp.lt.s32.totalorder %s15, 3
    %p239 = pnand %p237, %p238
    %p240 = pneg %p239
    // Predicated region
    $region9: #{graph_constructor_forward.1} parent=5 // pred_check
      _
    $region10: #{graph_constructor_forward.1} parent=5 // pred_check_branch
      %242 = sbr.rel (%p239) target = $region12
    $region11: #{graph_constructor_forward.1} parent=5 // pred_region
      %s243 = ssub.s32 %s15, 1
      // Predicated region
      $region13: #{graph_constructor_forward.1} parent=11 // pred_check
        %p244 = pneg %p62
      $region14: #{graph_constructor_forward.1} parent=11 // pred_check_branch
        %246 = sbr.rel (%p244) target = $region16
      $region15: #{graph_constructor_forward.1} parent=11 // pred_region
        _
      $region16: #{graph_constructor_forward.1} parent=11 // pred_fallthru
        _
      // Predicated region
      $region17: #{graph_constructor_forward.1} parent=11 // pred_check
        %p247 = pneg %p83
      $region18: #{graph_constructor_forward.1} parent=11 // pred_check_branch
        %249 = sbr.rel (%p247) target = $region20
      $region19: #{graph_constructor_forward.1} parent=11 // pred_region
        _
      $region20: #{graph_constructor_forward.1} parent=11 // pred_fallthru
        _
      // Predicated region
      $region21: #{graph_constructor_forward.1} parent=11 // pred_check
        %p250 = pneg %p104
      $region22: #{graph_constructor_forward.1} parent=11 // pred_check_branch
        %252 = sbr.rel (%p250) target = $region24
      $region23: #{graph_constructor_forward.1} parent=11 // pred_region
        _
      $region24: #{graph_constructor_forward.1} parent=11 // pred_fallthru
        _
      // Predicated region
      $region25: #{graph_constructor_forward.1} parent=11 // pred_check
        %p253 = pneg %p125
      $region26: #{graph_constructor_forward.1} parent=11 // pred_check_branch
        %255 = sbr.rel (%p253) target = $region28
      $region27: #{graph_constructor_forward.1} parent=11 // pred_region
        _
      $region28: #{graph_constructor_forward.1} parent=11 // pred_fallthru
        _
    $region12: #{graph_constructor_forward.1} parent=5 // pred_fallthru
      _
    %p256 = scmp.lt.s32.totalorder %s15, 2
    // Predicated region
    $region29: #{graph_constructor_forward.1} parent=5 // pred_check
      %p257 = pneg %p256
    $region30: #{graph_constructor_forward.1} parent=5 // pred_check_branch
      %259 = sbr.rel (%p257) target = $region32
    $region31: #{graph_constructor_forward.1} parent=5 // pred_region
      // Predicated region
      $region33: #{graph_constructor_forward.1} parent=31 // pred_check
        %p260 = pneg %p35
      $region34: #{graph_constructor_forward.1} parent=31 // pred_check_branch
        %262 = sbr.rel (%p260) target = $region36
      $region35: #{graph_constructor_forward.1} parent=31 // pred_region
        %p263 = scmp.lt.s32.totalorder %s15, 1
        %s264 = scalar_select %p263, %s15, 1
        %s265 = smul.addr %s264, 16
        %s266 = smul.addr %s265, 8
        %s267 = scalar_lea.vmem %s0, %s266
      $region36: #{graph_constructor_forward.1} parent=31 // pred_fallthru
        _
    $region32: #{graph_constructor_forward.1} parent=5 // pred_fallthru
      _
    %p268 = scmp.le.s32.totalorder 1, %s15
    %p269 = scmp.lt.s32.totalorder %s15, 3
    %p270 = pnand %p268, %p269
    %p271 = pneg %p270
    // Predicated region
    $region37: #{graph_constructor_forward.1} parent=5 // pred_check
      _
    $region38: #{graph_constructor_forward.1} parent=5 // pred_check_branch
      %273 = sbr.rel (%p270) target = $region40
    $region39: #{graph_constructor_forward.1} parent=5 // pred_region
      %s274 = ssub.s32 %s15, 1
      %p275 = scmp.lt.s32.totalorder %s20, 1
      %s276 = scalar_select %p275, %s20, 1
      %s277 = smul.addr %s276, 16
      %s278 = smul.addr %s277, 8
      %s279 = scalar_lea.vmem %s0, %s278
      %p280 = pneg %p41
      %p281 = pneg %p38
      %p282 = pneg %p62
      %p283 = pneg %p59
      %p284 = pneg %p83
      %p285 = pneg %p80
      %p286 = pneg %p104
      %p287 = pneg %p101
      %p288 = pneg %p125
      %p289 = pneg %p122
      %p290 = pneg %p151
      %p291 = pneg %p148
      %p292 = scmp.lt.s32.totalorder %s20, 1
      %s293 = scalar_select %p292, %s20, 1
      %s294 = smul.addr %s293, 2
      %s295 = smul.addr %s294, 8
      %s296 = scalar_lea.vmem %s5, %s295
      %p297 = pneg %p177
      %p298 = pneg %p174
      %p299 = scmp.lt.s32.totalorder %s20, 1
      %s300 = scalar_select %p299, %s20, 1
      %s301 = smul.addr %s300, 2
      %s302 = smul.addr %s301, 8
      %s303 = scalar_lea.vmem %s6, %s302
      %p304 = pneg %p203
      %p305 = pneg %p200
      %p306 = scmp.lt.s32.totalorder %s20, 1
      %s307 = scalar_select %p306, %s20, 1
      %s308 = smul.addr %s307, 2
      %s309 = smul.addr %s308, 8
      %s310 = scalar_lea.vmem %s7, %s309
      %p311 = pneg %p229
      %p312 = pneg %p226
      %p313 = scmp.lt.s32.totalorder %s20, 1
      %s314 = scalar_select %p313, %s20, 1
      %s315 = scalar_lea.vmem %s8, %s314
      %p316 = scmp.lt.s32.totalorder %s20, 1
      %s317 = scalar_select %p316, %s20, 1
      %s318 = smul.addr %s317, 16
      %s319 = smul.addr %s318, 8
      %s320 = scalar_lea.vmem %s0, %s319
      %p321 = scmp.lt.s32.totalorder %s20, 1
      %s322 = scalar_select %p321, %s20, 1
      %s323 = smul.addr %s322, 2
      %s324 = smul.addr %s323, 8
      %s325 = scalar_lea.vmem %s5, %s324
      %p326 = scmp.lt.s32.totalorder %s20, 1
      %s327 = scalar_select %p326, %s20, 1
      %s328 = smul.addr %s327, 2
      %s329 = smul.addr %s328, 8
      %s330 = scalar_lea.vmem %s6, %s329
      %p331 = scmp.lt.s32.totalorder %s20, 1
      %s332 = scalar_select %p331, %s20, 1
      %s333 = smul.addr %s332, 2
      %s334 = smul.addr %s333, 8
      %s335 = scalar_lea.vmem %s7, %s334
      %p336 = scmp.lt.s32.totalorder %s20, 1
      %s337 = scalar_select %p336, %s20, 1
      %s338 = scalar_lea.vmem %s8, %s337
      %v340 = vld [vmem:[%s320] sm:$0xff]
      %v341 = vld [vmem:[%s320 + $0x8] sm:$0xff]
      %v342 = vld [vmem:[%s320 + $0x10] sm:$0xff]
      %v343 = vld [vmem:[%s320 + $0x18] sm:$0xff]
      %v344 = vld [vmem:[%s320 + $0x20] sm:$0xff]
      %v345 = vld [vmem:[%s320 + $0x28] sm:$0xff]
      %v346 = vld [vmem:[%s320 + $0x30] sm:$0xff]
      %v347 = vld [vmem:[%s320 + $0x38] sm:$0xff]
      %v348 = vld [vmem:[%s320 + $0x40] sm:$0xff]
      %v349 = vld [vmem:[%s320 + $0x48] sm:$0xff]
      %v350 = vld [vmem:[%s320 + $0x50] sm:$0xff]
      %v351 = vld [vmem:[%s320 + $0x58] sm:$0xff]
      %v352 = vld [vmem:[%s320 + $0x60] sm:$0xff]
      %v353 = vld [vmem:[%s320 + $0x68] sm:$0xff]
      %v354 = vld [vmem:[%s320 + $0x70] sm:$0xff]
      %v355 = vld [vmem:[%s320 + $0x78] sm:$0xff]
      %v356 = vpack.c.bf16 %v341, %v340
      %v357 = vld [vmem:[%s1] sm:$0xf]
      %v358 = vld [vmem:[%s1 + $0x4] sm:$0xf]
      %v359 = vld [vmem:[%s1 + $0x8] sm:$0xf]
      %v360 = vld [vmem:[%s1 + $0xc] sm:$0xf]
      %v361 = vld [vmem:[%s1 + $0x10] sm:$0xf]
      %v362 = vld [vmem:[%s1 + $0x14] sm:$0xf]
      %v363 = vld [vmem:[%s1 + $0x18] sm:$0xf]
      %v364 = vld [vmem:[%s1 + $0x1c] sm:$0xf]
      %v365 = vld [vmem:[%s1 + $0x20] sm:$0xf]
      %v366 = vld [vmem:[%s1 + $0x24] sm:$0xf]
      %v367 = vld [vmem:[%s1 + $0x28] sm:$0xf]
      %v368 = vld [vmem:[%s1 + $0x2c] sm:$0xf]
      %v369 = vld [vmem:[%s1 + $0x30] sm:$0xf]
      %v370 = vld [vmem:[%s1 + $0x34] sm:$0xf]
      %v371 = vld [vmem:[%s1 + $0x38] sm:$0xf]
      %v372 = vld [vmem:[%s1 + $0x3c] sm:$0xf]
      %v373 = vld [vmem:[%s2] sm:$0x1]
      %v375 = vlaneseq
      %v376 = vshrl.u32 %v375, 7
      %v377 = vsub.s32 0, %v376
      %v378 = vrot.slane %v373, %v377
      %v396 = vunpack.c.l.b16 %v357
      %v397 = vunpack.c.l.b16 %v358
      %v398 = vunpack.c.l.b16 %v359
      %v399 = vunpack.c.l.b16 %v360
      %v400 = vunpack.c.l.b16 %v361
      %v401 = vunpack.c.l.b16 %v362
      %v402 = vunpack.c.l.b16 %v363
      %v403 = vunpack.c.l.b16 %v364
      %v404 = vunpack.c.l.b16 %v365
      %v405 = vunpack.c.l.b16 %v366
      %v406 = vunpack.c.l.b16 %v367
      %v407 = vunpack.c.l.b16 %v368
      %v408 = vunpack.c.l.b16 %v369
      %v409 = vunpack.c.l.b16 %v370
      %v410 = vunpack.c.l.b16 %v371
      %v411 = vunpack.c.l.b16 %v372
      %v412 = vpack.c.b16 %v397, %v396
      %v413 = vpack.c.b16 %v399, %v398
      %v414 = vpack.c.b16 %v401, %v400
      %v415 = vpack.c.b16 %v403, %v402
      %v416 = vpack.c.b16 %v405, %v404
      %v417 = vpack.c.b16 %v407, %v406
      %v418 = vpack.c.b16 %v409, %v408
      %v419 = vpack.c.b16 %v411, %v410
      %428 = vmatprep.subr.bf16.mxu0 0
      %429 = vmatpush1.bf16.msra.mxu0 %v412
      %430 = vmatprep.subr.bf16.mxu0 0
      %431 = vmatpush1.bf16.msra.mxu0 %v413
      %432 = vmatprep.subr.bf16.mxu0 0
      %433 = vmatpush1.bf16.msra.mxu0 %v414
      %434 = vmatprep.subr.bf16.mxu0 0
      %435 = vmatpush1.bf16.msra.mxu0 %v415
      %436 = vmatprep.subr.bf16.mxu0 0
      %437 = vmatpush1.bf16.msra.mxu0 %v416
      %438 = vmatprep.subr.bf16.mxu0 0
      %439 = vmatpush1.bf16.msra.mxu0 %v417
      %440 = vmatprep.subr.bf16.mxu0 0
      %441 = vmatpush1.bf16.msra.mxu0 %v418
      %442 = vmatprep.subr.bf16.mxu0 0
      %443 = vmatpush1.bf16.msra.mxu0 %v419
      %444 = vmatprep.subr.bf16.mxu0 0
      %445 = vmatpush1.bf16.msra.mxu0 0
      %446 = vmatprep.subr.bf16.mxu0 0
      %447 = vmatpush1.bf16.msra.mxu0 0
      %448 = vmatprep.subr.bf16.mxu0 0
      %449 = vmatpush1.bf16.msra.mxu0 0
      %450 = vmatprep.subr.bf16.mxu0 0
      %451 = vmatpush1.bf16.msra.mxu0 0
      %452 = vmatprep.subr.bf16.mxu0 0
      %453 = vmatpush1.bf16.msra.mxu0 0
      %454 = vmatprep.subr.bf16.mxu0 0
      %455 = vmatpush1.bf16.msra.mxu0 0
      %456 = vmatprep.subr.bf16.mxu0 0
      %457 = vmatpush1.bf16.msra.mxu0 0
      %458 = vmatprep.subr.bf16.mxu0 0
      %459 = vmatpush1.bf16.msra.mxu0 0
      %460 = vmatprep.mubr.bf16.mxu0 0
      %461 = vmatmul.mubr.bf16.gmra.mrb[0].mxu0 %v356
      %v462 = vpop.f32.mrb[0].mxu0
      %v463 = vadd.f32 %v378, %v462
      %v464 = vpop.f32.mrb[0].mxu0
      %v465 = vpop.f32.mrb[0].mxu0
      %v466 = vadd.f32 %v378, %v465
      %v467 = vpop.f32.mrb[0].mxu0
      %468 = vdwg.mxu0
      %v469 = vmax.f32 %v463, 0.0
      %v470 = vmax.f32 %v466, 0.0
      %v471 = vpack.c.bf16 %v470, %v469
      %v472 = vld [vmem:[%s3] sm:$0xf]
      %v473 = vld [vmem:[%s3 + $0x4] sm:$0xf]
      %v474 = vld [vmem:[%s3 + $0x8] sm:$0xf]
      %v475 = vld [vmem:[%s3 + $0xc] sm:$0xf]
      %v476 = vld [vmem:[%s3 + $0x10] sm:$0xf]
      %v477 = vld [vmem:[%s3 + $0x14] sm:$0xf]
      %v478 = vld [vmem:[%s3 + $0x18] sm:$0xf]
      %v479 = vld [vmem:[%s3 + $0x1c] sm:$0xf]
      %v480 = vld [vmem:[%s3 + $0x20] sm:$0xf]
      %v481 = vld [vmem:[%s3 + $0x24] sm:$0xf]
      %v482 = vld [vmem:[%s3 + $0x28] sm:$0xf]
      %v483 = vld [vmem:[%s3 + $0x2c] sm:$0xf]
      %v484 = vld [vmem:[%s3 + $0x30] sm:$0xf]
      %v485 = vld [vmem:[%s3 + $0x34] sm:$0xf]
      %v486 = vld [vmem:[%s3 + $0x38] sm:$0xf]
      %v487 = vld [vmem:[%s3 + $0x3c] sm:$0xf]
      %v488 = vld [vmem:[%s4] sm:$0x1]
      %v490 = vlaneseq
      %v491 = vshrl.u32 %v490, 7
      %v492 = vsub.s32 0, %v491
      %v493 = vrot.slane %v488, %v492
      %v511 = vunpack.c.l.b16 %v472
      %v512 = vunpack.c.l.b16 %v473
      %v513 = vunpack.c.l.b16 %v474
      %v514 = vunpack.c.l.b16 %v475
      %v515 = vunpack.c.l.b16 %v476
      %v516 = vunpack.c.l.b16 %v477
      %v517 = vunpack.c.l.b16 %v478
      %v518 = vunpack.c.l.b16 %v479
      %v519 = vunpack.c.l.b16 %v480
      %v520 = vunpack.c.l.b16 %v481
      %v521 = vunpack.c.l.b16 %v482
      %v522 = vunpack.c.l.b16 %v483
      %v523 = vunpack.c.l.b16 %v484
      %v524 = vunpack.c.l.b16 %v485
      %v525 = vunpack.c.l.b16 %v486
      %v526 = vunpack.c.l.b16 %v487
      %v527 = vpack.c.b16 %v512, %v511
      %v528 = vpack.c.b16 %v514, %v513
      %v529 = vpack.c.b16 %v516, %v515
      %v530 = vpack.c.b16 %v518, %v517
      %v531 = vpack.c.b16 %v520, %v519
      %v532 = vpack.c.b16 %v522, %v521
      %v533 = vpack.c.b16 %v524, %v523
      %v534 = vpack.c.b16 %v526, %v525
      %543 = vmatprep.subr.bf16.mxu0 0
      %544 = vmatpush1.bf16.msra.mxu0 %v527
      %545 = vmatprep.subr.bf16.mxu0 0
      %546 = vmatpush1.bf16.msra.mxu0 %v528
      %547 = vmatprep.subr.bf16.mxu0 0
      %548 = vmatpush1.bf16.msra.mxu0 %v529
      %549 = vmatprep.subr.bf16.mxu0 0
      %550 = vmatpush1.bf16.msra.mxu0 %v530
      %551 = vmatprep.subr.bf16.mxu0 0
      %552 = vmatpush1.bf16.msra.mxu0 %v531
      %553 = vmatprep.subr.bf16.mxu0 0
      %554 = vmatpush1.bf16.msra.mxu0 %v532
      %555 = vmatprep.subr.bf16.mxu0 0
      %556 = vmatpush1.bf16.msra.mxu0 %v533
      %557 = vmatprep.subr.bf16.mxu0 0
      %558 = vmatpush1.bf16.msra.mxu0 %v534
      %559 = vmatprep.subr.bf16.mxu0 0
      %560 = vmatpush1.bf16.msra.mxu0 0
      %561 = vmatprep.subr.bf16.mxu0 0
      %562 = vmatpush1.bf16.msra.mxu0 0
      %563 = vmatprep.subr.bf16.mxu0 0
      %564 = vmatpush1.bf16.msra.mxu0 0
      %565 = vmatprep.subr.bf16.mxu0 0
      %566 = vmatpush1.bf16.msra.mxu0 0
      %567 = vmatprep.subr.bf16.mxu0 0
      %568 = vmatpush1.bf16.msra.mxu0 0
      %569 = vmatprep.subr.bf16.mxu0 0
      %570 = vmatpush1.bf16.msra.mxu0 0
      %571 = vmatprep.subr.bf16.mxu0 0
      %572 = vmatpush1.bf16.msra.mxu0 0
      %573 = vmatprep.subr.bf16.mxu0 0
      %574 = vmatpush1.bf16.msra.mxu0 0
      %575 = vmatprep.mubr.bf16.mxu0 0
      %576 = vmatmul.mubr.bf16.gmra.mrb[0].mxu0 %v471
      %v577 = vpop.f32.mrb[0].mxu0
      %v578 = vadd.f32 %v493, %v577
      %v579 = vpop.f32.mrb[0].mxu0
      %v580 = vpop.f32.mrb[0].mxu0
      %v581 = vadd.f32 %v493, %v580
      %v582 = vpop.f32.mrb[0].mxu0
      %583 = vdwg.mxu0
      %v584 = vand.u32 2147483647, %v578
      %v585 = vand.u32 2147483647, %v581
      %v586 = vlaneseq
      %v587 = vand.u32 %v586, 127
      %vm588 = vcmp.lt.s32.totalorder %v587, 16
      %v589 = vsel %vm588, %v584, inf
      %v590 = vsel %vm588, %v585, inf
      %591 = vmin.xlane.f32.xlu0 %v589
      %v592 = vpop.xlane.xlu0 %591
      %593 = vmin.xlane.f32.xlu0 %v590
      %v594 = vpop.xlane.xlu0 %593
      %595 = vmax.xlane.f32.xlu0 %v584
      %v596 = vpop.xlane.xlu0 %595
      %597 = vmax.xlane.f32.xlu0 %v585
      %v598 = vpop.xlane.xlu0 %597
      %v599 = vsub.f32 %v596, %v592
      %v600 = vsub.f32 %v598, %v594
      %v601 = vadd.f32 %v599, 1e-08
      %v602 = vadd.f32 %v600, 1e-08
      %v603 = vrcp.pop %v601
      %v604 = vrcp.pop %v602
      %v605 = vsub.f32 %v584, %v592
      %v606 = vsub.f32 %v585, %v594
      %v607 = vmul.f32 %v605, %v603
      %v608 = vmul.f32 %v606, %v604
      %v609 = vsel %vm588, %v607, 0.0
      %v610 = vsel %vm588, %v608, 0.0
      %611 = vst [vmem:[%s325] sm:$0xff] %v609
      %612 = vst [vmem:[%s325 + $0x8] sm:$0xff] %v610
      %p613 = scmp.eq.s32.totalorder %s20, 0
      // Predicated region
      $region41: #{graph_constructor_forward.1} parent=39 // pred_check
        %p614 = pneg %p613
      $region42: #{graph_constructor_forward.1} parent=39 // pred_check_branch
        %616 = sbr.rel (%p614) target = $region44
      $region43: #{graph_constructor_forward.1} parent=39 // pred_region
        %v617 = vsel %vm588, %v607, -1.0
        %v618 = vsel %vm588, %v608, -1.0
        %619 = vmax.xlane.f32.xlu0 %v617
        %v620 = vpop.xlane.xlu0 %619
        %621 = vmax.xlane.f32.xlu0 %v618
        %v622 = vpop.xlane.xlu0 %621
        %vm623 = vcmp.ge.f32.partialorder %v617, %v620
        %vm624 = vcmp.ge.f32.partialorder %v618, %v622
        %v625 = vsel %vm623, -1.0, %v617
        %v626 = vsel %vm624, -1.0, %v618
        %627 = vmax.xlane.f32.xlu0 %v625
        %v628 = vpop.xlane.xlu0 %627
        %629 = vmax.xlane.f32.xlu0 %v626
        %v630 = vpop.xlane.xlu0 %629
        %vm631 = vcmp.ge.f32.partialorder %v625, %v628
        %vm632 = vcmp.ge.f32.partialorder %v626, %v630
        %v633 = vsel %vm631, -1.0, %v625
        %v634 = vsel %vm632, -1.0, %v626
        %635 = vmax.xlane.f32.xlu0 %v633
        %v636 = vpop.xlane.xlu0 %635
        %637 = vmax.xlane.f32.xlu0 %v634
        %v638 = vpop.xlane.xlu0 %637
        %vm639 = vcmp.ge.f32.partialorder %v633, %v636
        %vm640 = vcmp.ge.f32.partialorder %v634, %v638
        %v641 = vsel %vm639, -1.0, %v633
        %v642 = vsel %vm640, -1.0, %v634
        %643 = vmax.xlane.f32.xlu0 %v641
        %v644 = vpop.xlane.xlu0 %643
        %645 = vmax.xlane.f32.xlu0 %v642
        %v646 = vpop.xlane.xlu0 %645
        %vm647 = vcmp.ge.f32.partialorder %v617, %v644
        %vm648 = vcmp.ge.f32.partialorder %v618, %v646
        %v649 = vsel %vm647, %v609, 0.0
        %v650 = vsel %vm648, %v610, 0.0
        %651 = vst [vmem:[%s330] sm:$0xff] %v649
        %652 = vst [vmem:[%s330 + $0x8] sm:$0xff] %v650
        %v653 = vpack.c.bf16 %v650, %v649
        %v654 = vpack.c.bf16 %v343, %v342
        %v655 = vpack.c.bf16 %v345, %v344
        %v656 = vpack.c.bf16 %v347, %v346
        %v657 = vpack.c.bf16 %v349, %v348
        %v658 = vpack.c.bf16 %v351, %v350
        %v659 = vpack.c.bf16 %v353, %v352
        %v660 = vpack.c.bf16 %v355, %v354
        %661 = vmatprep.subr.bf16.mxu0 0
        %662 = vmatpush1.bf16.msra.mxu0 %v356
        %663 = vmatprep.subr.bf16.mxu0 0
        %664 = vmatpush1.bf16.msra.mxu0 %v654
        %665 = vmatprep.subr.bf16.mxu0 0
        %666 = vmatpush1.bf16.msra.mxu0 %v655
        %667 = vmatprep.subr.bf16.mxu0 0
        %668 = vmatpush1.bf16.msra.mxu0 %v656
        %669 = vmatprep.subr.bf16.mxu0 0
        %670 = vmatpush1.bf16.msra.mxu0 %v657
        %671 = vmatprep.subr.bf16.mxu0 0
        %672 = vmatpush1.bf16.msra.mxu0 %v658
        %673 = vmatprep.subr.bf16.mxu0 0
        %674 = vmatpush1.bf16.msra.mxu0 %v659
        %675 = vmatprep.subr.bf16.mxu0 0
        %676 = vmatpush1.bf16.msra.mxu0 %v660
        %677 = vmatprep.subr.bf16.mxu0 0
        %678 = vmatpush1.bf16.msra.mxu0 0
        %679 = vmatprep.subr.bf16.mxu0 0
        %680 = vmatpush1.bf16.msra.mxu0 0
        %681 = vmatprep.subr.bf16.mxu0 0
        %682 = vmatpush1.bf16.msra.mxu0 0
        %683 = vmatprep.subr.bf16.mxu0 0
        %684 = vmatpush1.bf16.msra.mxu0 0
        %685 = vmatprep.subr.bf16.mxu0 0
        %686 = vmatpush1.bf16.msra.mxu0 0
        %687 = vmatprep.subr.bf16.mxu0 0
        %688 = vmatpush1.bf16.msra.mxu0 0
        %689 = vmatprep.subr.bf16.mxu0 0
        %690 = vmatpush1.bf16.msra.mxu0 0
        %691 = vmatprep.subr.bf16.mxu0 0
        %692 = vmatpush1.bf16.msra.mxu0 0
        %693 = vmatprep.mubr.bf16.mxu0 0
        %694 = vmatmul.mubr.bf16.gmra.mrb[0].mxu0 %v653
        %v695 = vpop.f32.mrb[0].mxu0
        %v696 = vadd.f32 0.0, %v695
        %v697 = vpop.f32.mrb[0].mxu0
        %v698 = vpop.f32.mrb[0].mxu0
        %v699 = vadd.f32 0.0, %v698
        %v700 = vpop.f32.mrb[0].mxu0
        %701 = vdwg.mxu0
        %702 = vst [vmem:[%s335] sm:$0xff] %v696
        %703 = vst [vmem:[%s335 + $0x8] sm:$0xff] %v699
        %v704 = vsub.f32 %v696, %v340
        %v705 = vsub.f32 %v699, %v341
        %v706 = vmul.f32 %v704, %v704
        %v707 = vmul.f32 %v705, %v705
        %v708 = vadd.f32 %v706, %v707
        %709 = vadd.xlane.f32.xlu0 %v708
        %v710 = vpop.xlane.xlu0 %709
        %v711 = vrot.slane %v710, 4
        %v712 = vadd.f32 %v710, %v711
        %v713 = vrot.slane %v712, 2
        %v714 = vadd.f32 %v712, %v713
        %v715 = vrot.slane %v714, 1
        %v716 = vadd.f32 %v714, %v715
        %s717 = vtos %v716
        %v718 = vstv %s717
        %v719 = vmul.f32 %v718, 0.001953125
        %vm720 = vcmask 0
        %721 = vst.msk [vmem:[%s338] sm:$0x1] %vm720, %v719
      $region44: #{graph_constructor_forward.1} parent=39 // pred_fallthru
        _
      %p722 = scmp.ne.s32.totalorder %s20, 0
      // Predicated region
      $region45: #{graph_constructor_forward.1} parent=39 // pred_check
        %p723 = pneg %p722
      $region46: #{graph_constructor_forward.1} parent=39 // pred_check_branch
        %725 = sbr.rel (%p723) target = $region48
      $region47: #{graph_constructor_forward.1} parent=39 // pred_region
        %726 = vst [vmem:[%s330] sm:$0xff] 0.0
        %727 = vst [vmem:[%s330 + $0x8] sm:$0xff] 0.0
        %728 = vst [vmem:[%s335] sm:$0xff] 0.0
        %729 = vst [vmem:[%s335 + $0x8] sm:$0xff] 0.0
        %vm730 = vcmask 0
        %731 = vst.msk [vmem:[%s338] sm:$0x1] %vm730, 0.0
      $region48: #{graph_constructor_forward.1} parent=39 // pred_fallthru
        _
      %p732 = scmp.lt.s32.totalorder %s20, 1
      %s733 = scalar_select %p732, %s20, 1
      %s734 = smul.addr %s733, 2
      %s735 = smul.addr %s734, 8
      %s736 = scalar_lea.vmem %s5, %s735
      %p737 = scmp.lt.s32.totalorder %s20, 1
      %s738 = scalar_select %p737, %s20, 1
      %s739 = smul.addr %s738, 2
      %s740 = smul.addr %s739, 8
      %s741 = scalar_lea.vmem %s6, %s740
      %p742 = scmp.lt.s32.totalorder %s20, 1
      %s743 = scalar_select %p742, %s20, 1
      %s744 = smul.addr %s743, 2
      %s745 = smul.addr %s744, 8
      %s746 = scalar_lea.vmem %s7, %s745
      %p747 = scmp.lt.s32.totalorder %s20, 1
      %s748 = scalar_select %p747, %s20, 1
      %s749 = scalar_lea.vmem %s8, %s748
      // Predicated region
      $region49: #{graph_constructor_forward.1} parent=39 // pred_check
        %p750 = pneg %p148
      $region50: #{graph_constructor_forward.1} parent=39 // pred_check_branch
        %752 = sbr.rel (%p750) target = $region52
      $region51: #{graph_constructor_forward.1} parent=39 // pred_region
        _
      $region52: #{graph_constructor_forward.1} parent=39 // pred_fallthru
        _
      // Predicated region
      $region53: #{graph_constructor_forward.1} parent=39 // pred_check
        %p753 = pneg %p174
      $region54: #{graph_constructor_forward.1} parent=39 // pred_check_branch
        %755 = sbr.rel (%p753) target = $region56
      $region55: #{graph_constructor_forward.1} parent=39 // pred_region
        _
      $region56: #{graph_constructor_forward.1} parent=39 // pred_fallthru
        _
      // Predicated region
      $region57: #{graph_constructor_forward.1} parent=39 // pred_check
        %p756 = pneg %p200
      $region58: #{graph_constructor_forward.1} parent=39 // pred_check_branch
        %758 = sbr.rel (%p756) target = $region60
      $region59: #{graph_constructor_forward.1} parent=39 // pred_region
        _
      $region60: #{graph_constructor_forward.1} parent=39 // pred_fallthru
        _
      // Predicated region
      $region61: #{graph_constructor_forward.1} parent=39 // pred_check
        %p759 = pneg %p226
      $region62: #{graph_constructor_forward.1} parent=39 // pred_check_branch
        %761 = sbr.rel (%p759) target = $region64
      $region63: #{graph_constructor_forward.1} parent=39 // pred_region
        _
      $region64: #{graph_constructor_forward.1} parent=39 // pred_fallthru
        _
    $region40: #{graph_constructor_forward.1} parent=5 // pred_fallthru
      _
    %p762 = scmp.le.s32.totalorder 2, %s15
    // Predicated region
    $region65: #{graph_constructor_forward.1} parent=5 // pred_check
      %p763 = pneg %p762
    $region66: #{graph_constructor_forward.1} parent=5 // pred_check_branch
      %765 = sbr.rel (%p763) target = $region68
    $region67: #{graph_constructor_forward.1} parent=5 // pred_region
      %s766 = ssub.s32 %s15, 2
      // Predicated region
      $region69: #{graph_constructor_forward.1} parent=67 // pred_check
        %p767 = pneg %p154
      $region70: #{graph_constructor_forward.1} parent=67 // pred_check_branch
        %769 = sbr.rel (%p767) target = $region72
      $region71: #{graph_constructor_forward.1} parent=67 // pred_region
        %p770 = scmp.lt.s32.totalorder %s21, 1
        %s771 = scalar_select %p770, %s21, 1
        %s772 = smul.addr %s771, 2
        %s773 = smul.addr %s772, 8
        %s774 = scalar_lea.vmem %s5, %s773
      $region72: #{graph_constructor_forward.1} parent=67 // pred_fallthru
        _
      // Predicated region
      $region73: #{graph_constructor_forward.1} parent=67 // pred_check
        %p775 = pneg %p180
      $region74: #{graph_constructor_forward.1} parent=67 // pred_check_branch
        %777 = sbr.rel (%p775) target = $region76
      $region75: #{graph_constructor_forward.1} parent=67 // pred_region
        %p778 = scmp.lt.s32.totalorder %s21, 1
        %s779 = scalar_select %p778, %s21, 1
        %s780 = smul.addr %s779, 2
        %s781 = smul.addr %s780, 8
        %s782 = scalar_lea.vmem %s6, %s781
      $region76: #{graph_constructor_forward.1} parent=67 // pred_fallthru
        _
      // Predicated region
      $region77: #{graph_constructor_forward.1} parent=67 // pred_check
        %p783 = pneg %p206
      $region78: #{graph_constructor_forward.1} parent=67 // pred_check_branch
        %785 = sbr.rel (%p783) target = $region80
      $region79: #{graph_constructor_forward.1} parent=67 // pred_region
        %p786 = scmp.lt.s32.totalorder %s21, 1
        %s787 = scalar_select %p786, %s21, 1
        %s788 = smul.addr %s787, 2
        %s789 = smul.addr %s788, 8
        %s790 = scalar_lea.vmem %s7, %s789
      $region80: #{graph_constructor_forward.1} parent=67 // pred_fallthru
        _
      // Predicated region
      $region81: #{graph_constructor_forward.1} parent=67 // pred_check
        %p791 = pneg %p232
      $region82: #{graph_constructor_forward.1} parent=67 // pred_check_branch
        %793 = sbr.rel (%p791) target = $region84
      $region83: #{graph_constructor_forward.1} parent=67 // pred_region
        %p794 = scmp.lt.s32.totalorder %s21, 1
        %s795 = scalar_select %p794, %s21, 1
        %s796 = scalar_lea.vmem %s8, %s795
      $region84: #{graph_constructor_forward.1} parent=67 // pred_fallthru
        _
    $region68: #{graph_constructor_forward.1} parent=5 // pred_fallthru
      _
  $region6: #{graph_constructor_forward.1} parent=0 // loop_footer
    %s19 = sadd.s32 1, %s15
  $region7: #{graph_constructor_forward.1} parent=0 // loop_footer_branch
    %14 = sbr.rel target = $region3
  $region8: #{graph_constructor_forward.1} parent=0 // loop_exit
    _

</llo_original>
